<compile_context>
chip_gen: v7x
topology: tpu7x:2x2x1
jax: 0.10.0
libtpu: 0.0.40
codegen_flags: <defaults>
</compile_context>

<pallas_src>
import jax
import jax.numpy as jnp
from jax.experimental import pallas as pl
from jax.experimental.pallas import tpu as pltpu

INPUT_DIM = 48
HIDDEN_DIM = 128
OUTPUT_DIM = 64


def _mlp_kernel(x_ref, w1_ref, b1_ref, w2_ref, b2_ref, w3_ref, b3_ref, o_ref):
    # One batch tile fully resident in VMEM; three MXU matmuls, f32 accumulate.
    h = jnp.dot(x_ref[...], w1_ref[...], preferred_element_type=jnp.float32)
    h = jnp.maximum(h + b1_ref[...].astype(jnp.float32), 0.0)

    h = jnp.dot(h.astype(w2_ref.dtype), w2_ref[...],
                preferred_element_type=jnp.float32)
    h = jnp.maximum(h + b2_ref[...].astype(jnp.float32), 0.0)

    h = jnp.dot(h.astype(w3_ref.dtype), w3_ref[...],
                preferred_element_type=jnp.float32)
    h = jnp.maximum(h + b3_ref[...].astype(jnp.float32), 0.0)

    o_ref[...] = h.astype(o_ref.dtype)


def _round_up(n, m):
    return ((n + m - 1) // m) * m


def _choose_tiling(b, cap, *, split_threshold=2048, target_steps=4):
    """Pick (tile_batch, n_steps, padded_batch).

    - Padding bounded to a few rows (n_steps chosen before TB).
    - For large batches keep >= `target_steps` grid steps so the 'parallel'
      grid axis can be sharded across v7x's two TensorCores.
    """
    b8 = _round_up(max(b, 1), 8)
    n_steps = pl.cdiv(b8, cap)
    if b8 >= split_threshold:
        n_steps = max(n_steps, min(target_steps, pl.cdiv(b8, 512)))
    tb = _round_up(pl.cdiv(b8, n_steps), 8)
    n_steps = pl.cdiv(b8, tb)
    b_pad = n_steps * tb
    return tb, n_steps, b_pad


def tactile_linear_encoder(x, params, *, tile_batch_cap=8192, out_dtype=jnp.float32):
    """x: [B, ...] flattened to [B, input_dim]; returns [B, output_dim] out_dtype."""
    w1, b1, w2, b2, w3, b3 = params
    b = x.shape[0]
    x2d = x.reshape(b, -1)  # keep original dtype — no wrapper up-cast
    in_dim = x2d.shape[1]
    assert in_dim == w1.shape[0], "flattened input dim mismatch"
    out_dim = w3.shape[1]

    tb, n_steps, b_pad = _choose_tiling(b, tile_batch_cap)
    if b_pad != b:
        # Zero rows flow through bias+ReLU harmlessly and are sliced off below.
        x2d = jnp.pad(x2d, ((0, b_pad - b), (0, 0)))

    grid = (n_steps,)

    # Constant (per-grid-step) blocks: Pallas skips re-DMA when the block
    # index does not change across steps.
    def const_spec(arr):
        return pl.BlockSpec(arr.shape, lambda i: (0,) * arr.ndim)

    in_itemsize = jnp.dtype(x2d.dtype).itemsize
    out_itemsize = jnp.dtype(out_dtype).itemsize
    flops = b_pad * 2 * (in_dim * w1.shape[1]
                         + w2.shape[0] * w2.shape[1]
                         + w3.shape[0] * out_dim)
    bytes_accessed = (b_pad * in_dim * in_itemsize                    # x in
                      + b_pad * out_dim * out_itemsize                # out
                      + sum(int(p.size) * jnp.dtype(p.dtype).itemsize
                            for p in params))                         # weights

    out = pl.pallas_call(
        _mlp_kernel,
        out_shape=jax.ShapeDtypeStruct((b_pad, out_dim), out_dtype),
        grid=grid,
        in_specs=[
            pl.BlockSpec((tb, in_dim), lambda i: (i, 0)),
            const_spec(w1), const_spec(b1),
            const_spec(w2), const_spec(b2),
            const_spec(w3), const_spec(b3),
        ],
        out_specs=pl.BlockSpec((tb, out_dim), lambda i: (i, 0)),
        compiler_params=pltpu.CompilerParams(
            dimension_semantics=("parallel",)),
        cost_estimate=pl.CostEstimate(
            flops=flops, transcendentals=0, bytes_accessed=bytes_accessed),
    )(x2d, w1, b1, w2, b2, w3, b3)

    return out[:b] if b_pad != b else out


def init_params(key, input_dim=INPUT_DIM, hidden_dim=HIDDEN_DIM,
                output_dim=OUTPUT_DIM, dtype=jnp.float32):
    """PyTorch-style init: U(-1/sqrt(fan_in), +1/sqrt(fan_in)).
    Weights stored as [in, out] (transpose of nn.Linear's [out, in]).
    Pass dtype=jnp.bfloat16 to halve weight DMA (MXU still accumulates f32)."""
    ks = jax.random.split(key, 6)

    def linear(kw, kb, fan_in, fan_out):
        bound = 1.0 / jnp.sqrt(fan_in)
        w = jax.random.uniform(kw, (fan_in, fan_out), jnp.float32,
                               -bound, bound).astype(dtype)
        b_ = jax.random.uniform(kb, (1, fan_out), jnp.float32,
                                -bound, bound).astype(dtype)
        return w, b_

    w1, b1 = linear(ks[0], ks[1], input_dim, hidden_dim)
    w2, b2 = linear(ks[2], ks[3], hidden_dim, hidden_dim)
    w3, b3 = linear(ks[4], ks[5], hidden_dim, output_dim)
    return (w1, b1, w2, b2, w3, b3)


def reference(x, params):
    """Plain JAX reference of the PyTorch forward."""
    w1, b1, w2, b2, w3, b3 = params
    h = x.reshape(x.shape[0], -1).astype(jnp.float32)
    h = jnp.maximum(h @ w1.astype(jnp.float32) + b1.astype(jnp.float32), 0.0)
    h = jnp.maximum(h @ w2.astype(jnp.float32) + b2.astype(jnp.float32), 0.0)
    h = jnp.maximum(h @ w3.astype(jnp.float32) + b3.astype(jnp.float32), 0.0)
    return h


if __name__ == "__main__":
    key = jax.random.PRNGKey(0)
    k_x, k_p, k_x2 = jax.random.split(key, 3)
    params = init_params(k_p)

    # Small input: batch=2, flattens to input_dim=48 (16 taxels x 3 axes).
    x = jax.random.normal(k_x, (2, 16, 3), dtype=jnp.float32)
    out = jax.block_until_ready(tactile_linear_encoder(x, params))
    ref = reference(x, params)
    assert out.shape == (2, OUTPUT_DIM), out.shape
    assert jnp.allclose(out, ref, atol=1e-5, rtol=1e-5), "mismatch vs reference"

    # Second check: batch not a tile multiple + tiny cap to exercise the
    # multi-step grid and padding path.
    x2 = jax.random.normal(k_x2, (20, 16, 3), dtype=jnp.float32)
    out2 = jax.block_until_ready(
        tactile_linear_encoder(x2, params, tile_batch_cap=8))
    ref2 = reference(x2, params)
    assert out2.shape == (20, OUTPUT_DIM), out2.shape
    assert jnp.allclose(out2, ref2, atol=1e-5, rtol=1e-5), "mismatch (tiled)"

    print("KERNEL_OK")
</pallas_src>

<mosaic_0001>
module attributes {stable_mosaic.version = 11 : i64} {
  func.func @_mlp_kernel(%arg0: i32, %arg1: memref<8x48xf32, #tpu.memory_space<vmem>>, %arg2: memref<48x128xf32, #tpu.memory_space<vmem>>, %arg3: memref<1x128xf32, #tpu.memory_space<vmem>>, %arg4: memref<128x128xf32, #tpu.memory_space<vmem>>, %arg5: memref<1x128xf32, #tpu.memory_space<vmem>>, %arg6: memref<128x64xf32, #tpu.memory_space<vmem>>, %arg7: memref<1x64xf32, #tpu.memory_space<vmem>>, %arg8: memref<8x64xf32, #tpu.memory_space<vmem>>) attributes {dimension_semantics = [#tpu.dimension_semantics<parallel>], iteration_bounds = array<i64: 1>, scalar_prefetch = 0 : i64, scratch_operands = 0 : i64, tpu.core_type = #tpu.core_type<tc>, window_params = [{transform_indices = @transform_0, window_bounds = array<i64: 8, 48>}, {pipeline_mode = #tpu.pipeline_mode<synchronous>, transform_indices = @transform_1, window_bounds = array<i64: 48, 128>}, {pipeline_mode = #tpu.pipeline_mode<synchronous>, transform_indices = @transform_2, window_bounds = array<i64: 1, 128>}, {pipeline_mode = #tpu.pipeline_mode<synchronous>, transform_indices = @transform_3, window_bounds = array<i64: 128, 128>}, {pipeline_mode = #tpu.pipeline_mode<synchronous>, transform_indices = @transform_4, window_bounds = array<i64: 1, 128>}, {pipeline_mode = #tpu.pipeline_mode<synchronous>, transform_indices = @transform_5, window_bounds = array<i64: 128, 64>}, {pipeline_mode = #tpu.pipeline_mode<synchronous>, transform_indices = @transform_6, window_bounds = array<i64: 1, 64>}, {transform_indices = @transform_7, window_bounds = array<i64: 8, 64>}]} {
    %c0 = arith.constant 0 : index
    %c0_0 = arith.constant 0 : index
    %0 = vector.load %arg1[%c0, %c0_0] : memref<8x48xf32, #tpu.memory_space<vmem>>, vector<8x48xf32>
    %c0_1 = arith.constant 0 : index
    %c0_2 = arith.constant 0 : index
    %1 = vector.load %arg2[%c0_1, %c0_2] : memref<48x128xf32, #tpu.memory_space<vmem>>, vector<48x128xf32>
    %cst = arith.constant dense<0.000000e+00> : vector<8x128xf32>
    %2 = tpu.matmul %0, %1, %cst {dimension_numbers = #tpu.dot_dimension_numbers<[1], [0], [0], [1], [0, 0, 1, 1], [], []>} : vector<8x48xf32>, vector<48x128xf32>, vector<8x128xf32> -> vector<8x128xf32>
    %c0_3 = arith.constant 0 : index
    %c0_4 = arith.constant 0 : index
    %3 = vector.load %arg3[%c0_3, %c0_4] : memref<1x128xf32, #tpu.memory_space<vmem>>, vector<1x128xf32>
    %4 = vector.broadcast %3 : vector<1x128xf32> to vector<8x128xf32>
    %5 = arith.addf %2, %4 : vector<8x128xf32>
    %cst_5 = arith.constant 0.000000e+00 : f32
    %6 = vector.broadcast %cst_5 : f32 to vector<8x128xf32>
    %7 = arith.maximumf %5, %6 : vector<8x128xf32>
    %c0_6 = arith.constant 0 : index
    %c0_7 = arith.constant 0 : index
    %8 = vector.load %arg4[%c0_6, %c0_7] : memref<128x128xf32, #tpu.memory_space<vmem>>, vector<128x128xf32>
    %cst_8 = arith.constant dense<0.000000e+00> : vector<8x128xf32>
    %9 = tpu.matmul %7, %8, %cst_8 {dimension_numbers = #tpu.dot_dimension_numbers<[1], [0], [0], [1], [0, 0, 1, 1], [], []>} : vector<8x128xf32>, vector<128x128xf32>, vector<8x128xf32> -> vector<8x128xf32>
    %c0_9 = arith.constant 0 : index
    %c0_10 = arith.constant 0 : index
    %10 = vector.load %arg5[%c0_9, %c0_10] : memref<1x128xf32, #tpu.memory_space<vmem>>, vector<1x128xf32>
    %11 = vector.broadcast %10 : vector<1x128xf32> to vector<8x128xf32>
    %12 = arith.addf %9, %11 : vector<8x128xf32>
    %cst_11 = arith.constant 0.000000e+00 : f32
    %13 = vector.broadcast %cst_11 : f32 to vector<8x128xf32>
    %14 = arith.maximumf %12, %13 : vector<8x128xf32>
    %c0_12 = arith.constant 0 : index
    %c0_13 = arith.constant 0 : index
    %15 = vector.load %arg6[%c0_12, %c0_13] : memref<128x64xf32, #tpu.memory_space<vmem>>, vector<128x64xf32>
    %cst_14 = arith.constant dense<0.000000e+00> : vector<8x64xf32>
    %16 = tpu.matmul %14, %15, %cst_14 {dimension_numbers = #tpu.dot_dimension_numbers<[1], [0], [0], [1], [0, 0, 1, 1], [], []>} : vector<8x128xf32>, vector<128x64xf32>, vector<8x64xf32> -> vector<8x64xf32>
    %c0_15 = arith.constant 0 : index
    %c0_16 = arith.constant 0 : index
    %17 = vector.load %arg7[%c0_15, %c0_16] : memref<1x64xf32, #tpu.memory_space<vmem>>, vector<1x64xf32>
    %18 = vector.broadcast %17 : vector<1x64xf32> to vector<8x64xf32>
    %19 = arith.addf %16, %18 : vector<8x64xf32>
    %cst_17 = arith.constant 0.000000e+00 : f32
    %20 = vector.broadcast %cst_17 : f32 to vector<8x64xf32>
    %21 = arith.maximumf %19, %20 : vector<8x64xf32>
    %c0_18 = arith.constant 0 : index
    %c0_19 = arith.constant 0 : index
    %22 = vector.load %arg8[%c0_18, %c0_19] : memref<8x64xf32, #tpu.memory_space<vmem>>, vector<8x64xf32>
    tpu.vector_store %arg8[%c0_18, %c0_19], %21 {strides = array<i32>} : memref<8x64xf32, #tpu.memory_space<vmem>>, vector<8x64xf32>,
    return
  }
  func.func @transform_0(%arg0: i32) -> (i32, i32) {
    %c0_i32 = arith.constant 0 : i32
    %c0_i32_0 = arith.constant 0 : i32
    return %arg0, %c0_i32 : i32, i32
  }
  func.func @transform_1(%arg0: i32) -> (i32, i32) {
    %c0_i32 = arith.constant 0 : i32
    %c0_i32_0 = arith.constant 0 : i32
    %c0_i32_1 = arith.constant 0 : i32
    return %c0_i32, %c0_i32_0 : i32, i32
  }
  func.func @transform_2(%arg0: i32) -> (i32, i32) {
    %c0_i32 = arith.constant 0 : i32
    %c0_i32_0 = arith.constant 0 : i32
    %c0_i32_1 = arith.constant 0 : i32
    return %c0_i32, %c0_i32_0 : i32, i32
  }
  func.func @transform_3(%arg0: i32) -> (i32, i32) {
    %c0_i32 = arith.constant 0 : i32
    %c0_i32_0 = arith.constant 0 : i32
    %c0_i32_1 = arith.constant 0 : i32
    return %c0_i32, %c0_i32_0 : i32, i32
  }
  func.func @transform_4(%arg0: i32) -> (i32, i32) {
    %c0_i32 = arith.constant 0 : i32
    %c0_i32_0 = arith.constant 0 : i32
    %c0_i32_1 = arith.constant 0 : i32
    return %c0_i32, %c0_i32_0 : i32, i32
  }
  func.func @transform_5(%arg0: i32) -> (i32, i32) {
    %c0_i32 = arith.constant 0 : i32
    %c0_i32_0 = arith.constant 0 : i32
    %c0_i32_1 = arith.constant 0 : i32
    return %c0_i32, %c0_i32_0 : i32, i32
  }
  func.func @transform_6(%arg0: i32) -> (i32, i32) {
    %c0_i32 = arith.constant 0 : i32
    %c0_i32_0 = arith.constant 0 : i32
    %c0_i32_1 = arith.constant 0 : i32
    return %c0_i32, %c0_i32_0 : i32, i32
  }
  func.func @transform_7(%arg0: i32) -> (i32, i32) {
    %c0_i32 = arith.constant 0 : i32
    %c0_i32_0 = arith.constant 0 : i32
    return %arg0, %c0_i32 : i32, i32
  }
}

</mosaic_0001>

<llo_original>
// kernel: tpu_custom_call.1
$region0: #{tpu_custom_call.1}
  #allocation0 [shape = 'u32[]', space=smem, size = 0x4, offset = 0x4, fixed_abs, tag = 'smem constant byte address 0x4 - core index']
  #allocation1 [shape = 'u32[144,128]{1,0:T(1,128)}', space=vmem, size = 0x12000, scoped, tag = 'internal scratch']
  %s0 = inlined_call_operand.vmem [shape: f32[8,48], index: 0, kind: input, shape index: {}]
  %s1 = inlined_call_operand.vmem [shape: f32[48,128], index: 1, kind: input, shape index: {}]
  %s2 = inlined_call_operand.vmem [shape: f32[1,128], index: 2, kind: input, shape index: {}]
  %s3 = inlined_call_operand.vmem [shape: f32[128,128], index: 3, kind: input, shape index: {}]
  %s4 = inlined_call_operand.vmem [shape: f32[1,128], index: 4, kind: input, shape index: {}]
  %s5 = inlined_call_operand.vmem [shape: f32[128,64], index: 5, kind: input, shape index: {}]
  %s6 = inlined_call_operand.vmem [shape: f32[1,64], index: 6, kind: input, shape index: {}]
  %s7 = inlined_call_operand.hbm [shape: f32[8,64], index: 7, kind: output, shape index: {}]
  %s8 = sld [smem:[#allocation0]]
  $region38: #{tpu_custom_call.1} parent=0
    _
  %s10 = ssub.s32 1, %s8
  %s11 = scalar_select 0, %s10, %s8
  $region1: #{tpu_custom_call.1} parent=0
    #allocation2 [shape = 'u8[4096]{0}', space=vmem, size = 0x1000, scoped, tag = 'output window, operand 0, single buffered']
    #allocation3 [shape = 's32[1]{0}', space=sflag, size = 0x4, scoped, tag = 'scoped memory for tpu_custom_call.1']
    %12 = vsyncpa [#allocation3], 0
    // Predicated region
    $region2: #{tpu_custom_call.1} parent=1 // pred_check
      _
    $region3: #{tpu_custom_call.1} parent=1 // pred_check_branch
      %14 = sbr.rel (0) target = $region5
    $region4: #{tpu_custom_call.1} parent=1 // pred_region
      _
    $region5: #{tpu_custom_call.1} parent=1 // pred_fallthru
      _
    // Predicated region
    $region6: #{tpu_custom_call.1} parent=1 // pred_check
      _
    $region7: #{tpu_custom_call.1} parent=1 // pred_check_branch
      %16 = sbr.rel (0) target = $region9
    $region8: #{tpu_custom_call.1} parent=1 // pred_region
      _
    $region9: #{tpu_custom_call.1} parent=1 // pred_fallthru
      _
    // Predicated region
    $region10: #{tpu_custom_call.1} parent=1 // pred_check
      _
    $region11: #{tpu_custom_call.1} parent=1 // pred_check_branch
      %18 = sbr.rel (0) target = $region13
    $region12: #{tpu_custom_call.1} parent=1 // pred_region
      _
    $region13: #{tpu_custom_call.1} parent=1 // pred_fallthru
      _
    // Predicated region
    $region14: #{tpu_custom_call.1} parent=1 // pred_check
      _
    $region15: #{tpu_custom_call.1} parent=1 // pred_check_branch
      %20 = sbr.rel (0) target = $region17
    $region16: #{tpu_custom_call.1} parent=1 // pred_region
      _
    $region17: #{tpu_custom_call.1} parent=1 // pred_fallthru
      _
    // Predicated region
    $region18: #{tpu_custom_call.1} parent=1 // pred_check
      _
    $region19: #{tpu_custom_call.1} parent=1 // pred_check_branch
      %22 = sbr.rel (0) target = $region21
    $region20: #{tpu_custom_call.1} parent=1 // pred_region
      _
    $region21: #{tpu_custom_call.1} parent=1 // pred_fallthru
      _
    // Predicated region
    $region22: #{tpu_custom_call.1} parent=1 // pred_check
      _
    $region23: #{tpu_custom_call.1} parent=1 // pred_check_branch
      %24 = sbr.rel (0) target = $region25
    $region24: #{tpu_custom_call.1} parent=1 // pred_region
      _
    $region25: #{tpu_custom_call.1} parent=1 // pred_fallthru
      _
    // Predicated region
    $region26: #{tpu_custom_call.1} parent=1 // pred_check
      _
    $region27: #{tpu_custom_call.1} parent=1 // pred_check_branch
      %26 = sbr.rel (0) target = $region29
    $region28: #{tpu_custom_call.1} parent=1 // pred_region
      _
    $region29: #{tpu_custom_call.1} parent=1 // pred_fallthru
      _
    %v27 = vld [vmem:[%s0] sm:$0xff]
    %v28 = vld [vmem:[%s1] sm:$0xff]
    %v29 = vld [vmem:[%s1 + $0x8] sm:$0xff]
    %v30 = vld [vmem:[%s1 + $0x10] sm:$0xff]
    %v31 = vld [vmem:[%s1 + $0x18] sm:$0xff]
    %v32 = vld [vmem:[%s1 + $0x20] sm:$0xff]
    %v33 = vld [vmem:[%s1 + $0x28] sm:$0xff]
    %v34 = vld [vmem:[%s2] sm:$0x1]
    %v36 = vlaneseq
    %v37 = vshrl.u32 %v36, 7
    %v38 = vsub.s32 0, %v37
    %v39 = vrot.slane %v34, %v38
    %vm41 = vcmask 392192
    %v43 = vsel %vm41, %v27, 0
    %45 = vmatprep.subr.mxu0 0.0
    %46 = vmatpush1.msra.mxu0 %v28
    %47 = vmatprep.subr.mxu0 0.0
    %48 = vmatpush1.msra.mxu0 %v29
    %49 = vmatprep.subr.mxu0 0.0
    %50 = vmatpush1.msra.mxu0 %v30
    %51 = vmatprep.subr.mxu0 0.0
    %52 = vmatpush1.msra.mxu0 %v31
    %53 = vmatprep.subr.mxu0 0.0
    %54 = vmatpush1.msra.mxu0 %v32
    %55 = vmatprep.subr.mxu0 0.0
    %56 = vmatpush1.msra.mxu0 %v33
    %57 = vmatprep.subr.mxu0 0.0
    %58 = vmatpush1.msra.mxu0 0.0
    %59 = vmatprep.subr.mxu0 0.0
    %60 = vmatpush1.msra.mxu0 0.0
    %61 = vmatprep.subr.mxu0 0.0
    %62 = vmatpush1.msra.mxu0 0.0
    %63 = vmatprep.subr.mxu0 0.0
    %64 = vmatpush1.msra.mxu0 0.0
    %65 = vmatprep.subr.mxu0 0.0
    %66 = vmatpush1.msra.mxu0 0.0
    %67 = vmatprep.subr.mxu0 0.0
    %68 = vmatpush1.msra.mxu0 0.0
    %69 = vmatprep.subr.mxu0 0.0
    %70 = vmatpush1.msra.mxu0 0.0
    %71 = vmatprep.subr.mxu0 0.0
    %72 = vmatpush1.msra.mxu0 0.0
    %73 = vmatprep.subr.mxu0 0.0
    %74 = vmatpush1.msra.mxu0 0.0
    %75 = vmatprep.subr.mxu0 0.0
    %76 = vmatpush1.msra.mxu0 0.0
    %77 = vmatprep.subr.mxu0 0.0
    %78 = vmatpush1.msra.mxu0 0.0
    %79 = vmatprep.subr.mxu0 0.0
    %80 = vmatpush1.msra.mxu0 0.0
    %81 = vmatprep.subr.mxu0 0.0
    %82 = vmatpush1.msra.mxu0 0.0
    %83 = vmatprep.subr.mxu0 0.0
    %84 = vmatpush1.msra.mxu0 0.0
    %85 = vmatprep.subr.mxu0 0.0
    %86 = vmatpush1.msra.mxu0 0.0
    %87 = vmatprep.subr.mxu0 0.0
    %88 = vmatpush1.msra.mxu0 0.0
    %89 = vmatprep.subr.mxu0 0.0
    %90 = vmatpush1.msra.mxu0 0.0
    %91 = vmatprep.subr.mxu0 0.0
    %92 = vmatpush1.msra.mxu0 0.0
    %93 = vmatprep.subr.mxu0 0.0
    %94 = vmatpush1.msra.mxu0 0.0
    %95 = vmatprep.subr.mxu0 0.0
    %96 = vmatpush1.msra.mxu0 0.0
    %97 = vmatprep.subr.mxu0 0.0
    %98 = vmatpush1.msra.mxu0 0.0
    %99 = vmatprep.subr.mxu0 0.0
    %100 = vmatpush1.msra.mxu0 0.0
    %101 = vmatprep.subr.mxu0 0.0
    %102 = vmatpush1.msra.mxu0 0.0
    %103 = vmatprep.subr.mxu0 0.0
    %104 = vmatpush1.msra.mxu0 0.0
    %105 = vmatprep.subr.mxu0 0.0
    %106 = vmatpush1.msra.mxu0 0.0
    %107 = vmatprep.subr.mxu0 0.0
    %108 = vmatpush1.msra.mxu0 0.0
    %109 = vmatprep.mubr.f32.mxu0 0.0
    %110 = vmatmul.mubr.f32.gmra.mrb[0].mxu0 %v43
    %v111 = vpop.f32.mrb[0].mxu0
    %v112 = vadd.f32 %v39, %v111
    %v113 = vpop.f32.mrb[0].mxu0
    %114 = vdwg.mxu0
    %v115 = vmax.f32 %v112, 0.0
    %v116 = vld [vmem:[%s3] sm:$0xff]
    %v117 = vld [vmem:[%s3 + $0x8] sm:$0xff]
    %v118 = vld [vmem:[%s3 + $0x10] sm:$0xff]
    %v119 = vld [vmem:[%s3 + $0x18] sm:$0xff]
    %v120 = vld [vmem:[%s3 + $0x20] sm:$0xff]
    %v121 = vld [vmem:[%s3 + $0x28] sm:$0xff]
    %v122 = vld [vmem:[%s3 + $0x30] sm:$0xff]
    %v123 = vld [vmem:[%s3 + $0x38] sm:$0xff]
    %v124 = vld [vmem:[%s3 + $0x40] sm:$0xff]
    %v125 = vld [vmem:[%s3 + $0x48] sm:$0xff]
    %v126 = vld [vmem:[%s3 + $0x50] sm:$0xff]
    %v127 = vld [vmem:[%s3 + $0x58] sm:$0xff]
    %v128 = vld [vmem:[%s3 + $0x60] sm:$0xff]
    %v129 = vld [vmem:[%s3 + $0x68] sm:$0xff]
    %v130 = vld [vmem:[%s3 + $0x70] sm:$0xff]
    %v131 = vld [vmem:[%s3 + $0x78] sm:$0xff]
    %v132 = vld [vmem:[%s4] sm:$0x1]
    %v134 = vlaneseq
    %v135 = vshrl.u32 %v134, 7
    %v136 = vsub.s32 0, %v135
    %v137 = vrot.slane %v132, %v136
    %139 = vmatprep.subr.mxu0 0.0
    %140 = vmatpush1.msra.mxu0 %v116
    %141 = vmatprep.subr.mxu0 0.0
    %142 = vmatpush1.msra.mxu0 %v117
    %143 = vmatprep.subr.mxu0 0.0
    %144 = vmatpush1.msra.mxu0 %v118
    %145 = vmatprep.subr.mxu0 0.0
    %146 = vmatpush1.msra.mxu0 %v119
    %147 = vmatprep.subr.mxu0 0.0
    %148 = vmatpush1.msra.mxu0 %v120
    %149 = vmatprep.subr.mxu0 0.0
    %150 = vmatpush1.msra.mxu0 %v121
    %151 = vmatprep.subr.mxu0 0.0
    %152 = vmatpush1.msra.mxu0 %v122
    %153 = vmatprep.subr.mxu0 0.0
    %154 = vmatpush1.msra.mxu0 %v123
    %155 = vmatprep.subr.mxu0 0.0
    %156 = vmatpush1.msra.mxu0 %v124
    %157 = vmatprep.subr.mxu0 0.0
    %158 = vmatpush1.msra.mxu0 %v125
    %159 = vmatprep.subr.mxu0 0.0
    %160 = vmatpush1.msra.mxu0 %v126
    %161 = vmatprep.subr.mxu0 0.0
    %162 = vmatpush1.msra.mxu0 %v127
    %163 = vmatprep.subr.mxu0 0.0
    %164 = vmatpush1.msra.mxu0 %v128
    %165 = vmatprep.subr.mxu0 0.0
    %166 = vmatpush1.msra.mxu0 %v129
    %167 = vmatprep.subr.mxu0 0.0
    %168 = vmatpush1.msra.mxu0 %v130
    %169 = vmatprep.subr.mxu0 0.0
    %170 = vmatpush1.msra.mxu0 %v131
    %171 = vmatprep.subr.mxu0 0.0
    %172 = vmatpush1.msra.mxu0 0.0
    %173 = vmatprep.subr.mxu0 0.0
    %174 = vmatpush1.msra.mxu0 0.0
    %175 = vmatprep.subr.mxu0 0.0
    %176 = vmatpush1.msra.mxu0 0.0
    %177 = vmatprep.subr.mxu0 0.0
    %178 = vmatpush1.msra.mxu0 0.0
    %179 = vmatprep.subr.mxu0 0.0
    %180 = vmatpush1.msra.mxu0 0.0
    %181 = vmatprep.subr.mxu0 0.0
    %182 = vmatpush1.msra.mxu0 0.0
    %183 = vmatprep.subr.mxu0 0.0
    %184 = vmatpush1.msra.mxu0 0.0
    %185 = vmatprep.subr.mxu0 0.0
    %186 = vmatpush1.msra.mxu0 0.0
    %187 = vmatprep.subr.mxu0 0.0
    %188 = vmatpush1.msra.mxu0 0.0
    %189 = vmatprep.subr.mxu0 0.0
    %190 = vmatpush1.msra.mxu0 0.0
    %191 = vmatprep.subr.mxu0 0.0
    %192 = vmatpush1.msra.mxu0 0.0
    %193 = vmatprep.subr.mxu0 0.0
    %194 = vmatpush1.msra.mxu0 0.0
    %195 = vmatprep.subr.mxu0 0.0
    %196 = vmatpush1.msra.mxu0 0.0
    %197 = vmatprep.subr.mxu0 0.0
    %198 = vmatpush1.msra.mxu0 0.0
    %199 = vmatprep.subr.mxu0 0.0
    %200 = vmatpush1.msra.mxu0 0.0
    %201 = vmatprep.subr.mxu0 0.0
    %202 = vmatpush1.msra.mxu0 0.0
    %203 = vmatprep.mubr.f32.mxu0 0.0
    %204 = vmatmul.mubr.f32.gmra.mrb[0].mxu0 %v115
    %v205 = vpop.f32.mrb[0].mxu0
    %v206 = vadd.f32 %v137, %v205
    %v207 = vpop.f32.mrb[0].mxu0
    %208 = vdwg.mxu0
    %v209 = vmax.f32 %v206, 0.0
    %v210 = vld [vmem:[%s5] sm:$0xff]
    %v211 = vld [vmem:[%s5 + $0x8] sm:$0xff]
    %v212 = vld [vmem:[%s5 + $0x10] sm:$0xff]
    %v213 = vld [vmem:[%s5 + $0x18] sm:$0xff]
    %v214 = vld [vmem:[%s5 + $0x20] sm:$0xff]
    %v215 = vld [vmem:[%s5 + $0x28] sm:$0xff]
    %v216 = vld [vmem:[%s5 + $0x30] sm:$0xff]
    %v217 = vld [vmem:[%s5 + $0x38] sm:$0xff]
    %v218 = vld [vmem:[%s5 + $0x40] sm:$0xff]
    %v219 = vld [vmem:[%s5 + $0x48] sm:$0xff]
    %v220 = vld [vmem:[%s5 + $0x50] sm:$0xff]
    %v221 = vld [vmem:[%s5 + $0x58] sm:$0xff]
    %v222 = vld [vmem:[%s5 + $0x60] sm:$0xff]
    %v223 = vld [vmem:[%s5 + $0x68] sm:$0xff]
    %v224 = vld [vmem:[%s5 + $0x70] sm:$0xff]
    %v225 = vld [vmem:[%s5 + $0x78] sm:$0xff]
    %v226 = vld [vmem:[%s6] sm:$0x1]
    %v228 = vlaneseq
    %v229 = vshrl.u32 %v228, 7
    %v230 = vsub.s32 0, %v229
    %v231 = vrot.slane %v226, %v230
    %233 = vmatprep.subr.mxu0 0.0
    %234 = vmatpush1.msra.mxu0 %v210
    %235 = vmatprep.subr.mxu0 0.0
    %236 = vmatpush1.msra.mxu0 %v211
    %237 = vmatprep.subr.mxu0 0.0
    %238 = vmatpush1.msra.mxu0 %v212
    %239 = vmatprep.subr.mxu0 0.0
    %240 = vmatpush1.msra.mxu0 %v213
    %241 = vmatprep.subr.mxu0 0.0
    %242 = vmatpush1.msra.mxu0 %v214
    %243 = vmatprep.subr.mxu0 0.0
    %244 = vmatpush1.msra.mxu0 %v215
    %245 = vmatprep.subr.mxu0 0.0
    %246 = vmatpush1.msra.mxu0 %v216
    %247 = vmatprep.subr.mxu0 0.0
    %248 = vmatpush1.msra.mxu0 %v217
    %249 = vmatprep.subr.mxu0 0.0
    %250 = vmatpush1.msra.mxu0 %v218
    %251 = vmatprep.subr.mxu0 0.0
    %252 = vmatpush1.msra.mxu0 %v219
    %253 = vmatprep.subr.mxu0 0.0
    %254 = vmatpush1.msra.mxu0 %v220
    %255 = vmatprep.subr.mxu0 0.0
    %256 = vmatpush1.msra.mxu0 %v221
    %257 = vmatprep.subr.mxu0 0.0
    %258 = vmatpush1.msra.mxu0 %v222
    %259 = vmatprep.subr.mxu0 0.0
    %260 = vmatpush1.msra.mxu0 %v223
    %261 = vmatprep.subr.mxu0 0.0
    %262 = vmatpush1.msra.mxu0 %v224
    %263 = vmatprep.subr.mxu0 0.0
    %264 = vmatpush1.msra.mxu0 %v225
    %265 = vmatprep.subr.mxu0 0.0
    %266 = vmatpush1.msra.mxu0 0.0
    %267 = vmatprep.subr.mxu0 0.0
    %268 = vmatpush1.msra.mxu0 0.0
    %269 = vmatprep.subr.mxu0 0.0
    %270 = vmatpush1.msra.mxu0 0.0
    %271 = vmatprep.subr.mxu0 0.0
    %272 = vmatpush1.msra.mxu0 0.0
    %273 = vmatprep.subr.mxu0 0.0
    %274 = vmatpush1.msra.mxu0 0.0
    %275 = vmatprep.subr.mxu0 0.0
    %276 = vmatpush1.msra.mxu0 0.0
    %277 = vmatprep.subr.mxu0 0.0
    %278 = vmatpush1.msra.mxu0 0.0
    %279 = vmatprep.subr.mxu0 0.0
    %280 = vmatpush1.msra.mxu0 0.0
    %281 = vmatprep.subr.mxu0 0.0
    %282 = vmatpush1.msra.mxu0 0.0
    %283 = vmatprep.subr.mxu0 0.0
    %284 = vmatpush1.msra.mxu0 0.0
    %285 = vmatprep.subr.mxu0 0.0
    %286 = vmatpush1.msra.mxu0 0.0
    %287 = vmatprep.subr.mxu0 0.0
    %288 = vmatpush1.msra.mxu0 0.0
    %289 = vmatprep.subr.mxu0 0.0
    %290 = vmatpush1.msra.mxu0 0.0
    %291 = vmatprep.subr.mxu0 0.0
    %292 = vmatpush1.msra.mxu0 0.0
    %293 = vmatprep.subr.mxu0 0.0
    %294 = vmatpush1.msra.mxu0 0.0
    %295 = vmatprep.subr.mxu0 0.0
    %296 = vmatpush1.msra.mxu0 0.0
    %297 = vmatprep.mubr.f32.mxu0 0.0
    %298 = vmatmul.mubr.f32.gmra.mrb[0].mxu0 %v209
    %v299 = vpop.f32.mrb[0].mxu0
    %v300 = vadd.f32 %v231, %v299
    %v301 = vpop.f32.mrb[0].mxu0
    %302 = vdwg.mxu0
    %v303 = vmax.f32 %v300, 0.0
    %vm304 = vcmask 523264
    %305 = vst.msk [vmem:[#allocation2] sm:$0xff] %vm304, %v303
    // Predicated region
    $region30: #{tpu_custom_call.1} parent=1 // pred_check
      _
    $region31: #{tpu_custom_call.1} parent=1 // pred_check_branch
      %307 = sbr.rel (0) target = $region33
    $region32: #{tpu_custom_call.1} parent=1 // pred_region
      %s309 = ssub.s32 128, 128
      %310 = vsyncadd [#allocation3], %s309
      %s312 = sshll.u32 [#allocation2], 4
      %s313 = int_to_ptr.vmem [resolvable:$true] %s312
      %315 = dma.vmem_to_hbm [thread:$0]  %s313, 128, %s7, [#allocation3]
    $region33: #{tpu_custom_call.1} parent=1 // pred_fallthru
      _
    // Predicated region
    $region34: #{tpu_custom_call.1} parent=1 // pred_check
      _
    $region35: #{tpu_custom_call.1} parent=1 // pred_check_branch
      %317 = sbr.rel (0) target = $region37
    $region36: #{tpu_custom_call.1} parent=1 // pred_region
      %318 = dma.done [#allocation3], 128
    $region37: #{tpu_custom_call.1} parent=1 // pred_fallthru
      _
    %319 = vsyncpa [#allocation3], 1

</llo_original>
